<compile_context>
chip_gen: v6e
topology: v6e:2x2x1
jax: 0.10.0
libtpu: 0.0.40
codegen_flags: <defaults>
</compile_context>

<pallas_src>
import functools

import jax
import jax.numpy as jnp
from jax.experimental import pallas as pl
from jax.experimental.pallas import tpu as pltpu


def _round_up(n: int, m: int) -> int:
    return ((n + m - 1) // m) * m


def _vmem_budget_bytes() -> int:
    """Per-generation scoped VMEM budget (v7x: 64 MiB phys -> 48 MiB; v5e/v6e: 96 MiB)."""
    try:
        cap = int(pltpu.get_tpu_info().vmem_capacity_bytes)
    except Exception:
        cap = 64 << 20  # assume the smallest (v7x-sized) VMEM if the query fails
    return min(96 << 20, (cap * 3) // 4)


def _mlp_kernel(x_ref, w1_ref, b1_ref, w2_ref, b2_ref, w3_ref, b3_ref, o_ref):
    out_dim = o_ref.shape[-1]
    # Layer 1: Linear (bf16 MXU inputs, f32 accumulation) + bias + ReLU.
    x = x_ref[...].astype(w1_ref.dtype)            # cast in-kernel (VPU has slack)
    h1 = jnp.dot(x, w1_ref[...], preferred_element_type=jnp.float32)
    h1 = jnp.maximum(h1 + b1_ref[...], 0.0)
    # Layer 2: Linear + bias + ReLU.
    h2 = jnp.dot(h1.astype(w2_ref.dtype), w2_ref[...],
                 preferred_element_type=jnp.float32)
    h2 = jnp.maximum(h2 + b2_ref[...], 0.0)
    # Head: matmul against the lane-padded (128-wide) w3 for a clean MXU shape,
    # then slice to the true out_dim so only out_dim f32 columns hit HBM.
    h3 = jnp.dot(h2.astype(w3_ref.dtype), w3_ref[...],
                 preferred_element_type=jnp.float32)
    o_ref[...] = (h3[:, :out_dim] + b3_ref[...]).astype(o_ref.dtype)


@functools.partial(jax.jit, static_argnames=("block_b",))
def multihead_mlp_pallas(x, params, *, block_b: int = 4096):
    """3-layer MLP (Linear->ReLU->Linear->ReLU->Linear) in one Pallas kernel.

    x: [B, input_dim] float32
    params: w1 [in,h1], b1 [1,h1], w2 [h1,h2], b2 [1,h2], w3 [h2,out], b3 [1,out]
            (weights stored [in, out])
    returns: [B, out] float32
    """
    B, in_dim = x.shape
    h1_dim = params["w1"].shape[1]
    h2_dim = params["w2"].shape[1]
    out_dim = params["w3"].shape[1]
    w3_pad = _round_up(max(out_dim, 128), 128)     # MXU-friendly head width
    compute_dtype = jnp.bfloat16

    vmem_budget = _vmem_budget_bytes()

    # ---- batch tiling ----------------------------------------------------
    b_pad = _round_up(B, 8)                        # pad only to the sublane granule
    # Rough per-row VMEM estimate (double-buffered x / out tiles + in-kernel
    # f32 activations + bf16 casts).  Used only as a safety cap on the tile.
    per_row = (4 * (2 * in_dim + 2 * out_dim)
               + 4 * (h1_dim + h2_dim + w3_pad)
               + 2 * (in_dim + h1_dim + h2_dim))
    tb_cap = max(8, ((vmem_budget - (4 << 20)) // per_row) // 8 * 8)
    tb = min(_round_up(block_b, 8), b_pad, tb_cap)
    # Keep >=2 grid steps for big batches so ("parallel",) can use both TCs (v7x).
    if tb == b_pad and b_pad >= 2048:
        tb = _round_up((b_pad + 1) // 2, 8)
    nb = -(-b_pad // tb)                           # cdiv; Pallas masks the boundary block

    # ---- operand prep (weights tiny; x stays f32 and is cast in-kernel) ---
    xp = x if b_pad == B else jnp.pad(x, ((0, b_pad - B), (0, 0)))
    w1 = params["w1"].astype(compute_dtype)
    w2 = params["w2"].astype(compute_dtype)
    w3 = params["w3"]
    if w3_pad != out_dim:
        w3 = jnp.pad(w3, ((0, 0), (0, w3_pad - out_dim)))
    w3 = w3.astype(compute_dtype)
    b1 = params["b1"].astype(jnp.float32)
    b2 = params["b2"].astype(jnp.float32)
    b3 = params["b3"].astype(jnp.float32)          # stays at true out_dim width

    # Weights / biases: constant index_map -> stay VMEM-resident across steps.
    # (pipeline_mode=pl.Buffered(1) would shave their spare double-buffer copy,
    #  ~150 KB total, negligible next to the batch-tile budget — omitted.)
    def resident(a):
        return pl.BlockSpec(a.shape, lambda i: (0,) * a.ndim)

    out = pl.pallas_call(
        _mlp_kernel,
        out_shape=jax.ShapeDtypeStruct((b_pad, out_dim), jnp.float32),
        grid=(nb,),
        in_specs=[
            pl.BlockSpec((tb, in_dim), lambda i: (i, 0)),   # x: tiled over batch
            resident(w1), resident(b1),
            resident(w2), resident(b2),
            resident(w3), resident(b3),
        ],
        out_specs=pl.BlockSpec((tb, out_dim), lambda i: (i, 0)),
        compiler_params=pltpu.CompilerParams(
            dimension_semantics=("parallel",),      # megacore sharding on v7x
            vmem_limit_bytes=int(vmem_budget)),
    )(xp, w1, b1, w2, b2, w3, b3)

    return out if b_pad == B else out[:B]


def init_params(key, input_dim, hidden_dims=(128, 128), output_dim=3):
    """Deterministic init mirroring nn.Linear shapes (stored as [in, out])."""
    dims = [input_dim] + list(hidden_dims) + [output_dim]
    params = {}
    for i in range(len(dims) - 1):
        key, kw, kb = jax.random.split(key, 3)
        bound = 1.0 / jnp.sqrt(dims[i])
        params[f"w{i+1}"] = jax.random.uniform(
            kw, (dims[i], dims[i + 1]), jnp.float32, -bound, bound)
        params[f"b{i+1}"] = jax.random.uniform(
            kb, (1, dims[i + 1]), jnp.float32, -bound, bound)
    return params


def reference_mlp(x, params, compute_dtype=jnp.bfloat16):
    """Same math as the kernel: bf16 matmul inputs, f32 accumulation."""
    cd = compute_dtype
    h1 = jnp.dot(x.astype(cd), params["w1"].astype(cd),
                 preferred_element_type=jnp.float32) + params["b1"]
    h1 = jnp.maximum(h1, 0.0)
    h2 = jnp.dot(h1.astype(cd), params["w2"].astype(cd),
                 preferred_element_type=jnp.float32) + params["b2"]
    h2 = jnp.maximum(h2, 0.0)
    return jnp.dot(h2.astype(cd), params["w3"].astype(cd),
                   preferred_element_type=jnp.float32) + params["b3"]


if __name__ == "__main__":
    key = jax.random.PRNGKey(0)
    key, kx = jax.random.split(key)

    batch = 8
    input_dim = 32
    hidden_dims = (128, 128)
    output_dim = 3

    x = jax.random.normal(kx, (batch, input_dim), jnp.float32)
    params = init_params(key, input_dim, hidden_dims, output_dim)

    out = jax.block_until_ready(multihead_mlp_pallas(x, params))
    ref = reference_mlp(x, params)
    assert out.shape == (batch, output_dim), out.shape
    assert jnp.allclose(out, ref, atol=1e-2, rtol=1e-2), "mismatch vs reference"

    # Non-8-multiple batch (exercises the 8-row padding path).
    key, kx2 = jax.random.split(key)
    x2 = jax.random.normal(kx2, (20, input_dim), jnp.float32)
    out2 = jax.block_until_ready(multihead_mlp_pallas(x2, params))
    ref2 = reference_mlp(x2, params)
    assert out2.shape == (20, output_dim), out2.shape
    assert jnp.allclose(out2, ref2, atol=1e-2, rtol=1e-2), "mismatch (padded batch)"

    # Multi-step grid + masked boundary block (300 rows, 128-row tiles -> 3 steps).
    key, kx3 = jax.random.split(key)
    x3 = jax.random.normal(kx3, (300, input_dim), jnp.float32)
    out3 = jax.block_until_ready(multihead_mlp_pallas(x3, params, block_b=128))
    ref3 = reference_mlp(x3, params)
    assert out3.shape == (300, output_dim), out3.shape
    assert jnp.allclose(out3, ref3, atol=1e-2, rtol=1e-2), "mismatch (multi-tile grid)"

    print("KERNEL_OK")
</pallas_src>

<mosaic_0001>
module attributes {stable_mosaic.version = 11 : i64} {
  func.func @_mlp_kernel(%arg0: i32, %arg1: memref<8x32xf32, #tpu.memory_space<vmem>>, %arg2: memref<32x128xbf16, #tpu.memory_space<vmem>>, %arg3: memref<1x128xf32, #tpu.memory_space<vmem>>, %arg4: memref<128x128xbf16, #tpu.memory_space<vmem>>, %arg5: memref<1x128xf32, #tpu.memory_space<vmem>>, %arg6: memref<128x128xbf16, #tpu.memory_space<vmem>>, %arg7: memref<1x3xf32, #tpu.memory_space<vmem>>, %arg8: memref<8x3xf32, #tpu.memory_space<vmem>>) attributes {dimension_semantics = [#tpu.dimension_semantics<parallel>], iteration_bounds = array<i64: 1>, scalar_prefetch = 0 : i64, scratch_operands = 0 : i64, tpu.core_type = #tpu.core_type<tc>, window_params = [{transform_indices = @transform_0, window_bounds = array<i64: 8, 32>}, {pipeline_mode = #tpu.pipeline_mode<synchronous>, transform_indices = @transform_1, window_bounds = array<i64: 32, 128>}, {pipeline_mode = #tpu.pipeline_mode<synchronous>, transform_indices = @transform_2, window_bounds = array<i64: 1, 128>}, {pipeline_mode = #tpu.pipeline_mode<synchronous>, transform_indices = @transform_3, window_bounds = array<i64: 128, 128>}, {pipeline_mode = #tpu.pipeline_mode<synchronous>, transform_indices = @transform_4, window_bounds = array<i64: 1, 128>}, {pipeline_mode = #tpu.pipeline_mode<synchronous>, transform_indices = @transform_5, window_bounds = array<i64: 128, 128>}, {pipeline_mode = #tpu.pipeline_mode<synchronous>, transform_indices = @transform_6, window_bounds = array<i64: 1, 3>}, {transform_indices = @transform_7, window_bounds = array<i64: 8, 3>}]} {
    %c0 = arith.constant 0 : index
    %c0_0 = arith.constant 0 : index
    %0 = vector.load %arg1[%c0, %c0_0] : memref<8x32xf32, #tpu.memory_space<vmem>>, vector<8x32xf32>
    %1 = arith.truncf %0 : vector<8x32xf32> to vector<8x32xbf16>
    %c0_1 = arith.constant 0 : index
    %c0_2 = arith.constant 0 : index
    %2 = vector.load %arg2[%c0_1, %c0_2] : memref<32x128xbf16, #tpu.memory_space<vmem>>, vector<32x128xbf16>
    %cst = arith.constant dense<0.000000e+00> : vector<8x128xf32>
    %3 = tpu.matmul %1, %2, %cst {dimension_numbers = #tpu.dot_dimension_numbers<[1], [0], [0], [1], [0, 0, 1, 1], [], []>} : vector<8x32xbf16>, vector<32x128xbf16>, vector<8x128xf32> -> vector<8x128xf32>
    %c0_3 = arith.constant 0 : index
    %c0_4 = arith.constant 0 : index
    %4 = vector.load %arg3[%c0_3, %c0_4] : memref<1x128xf32, #tpu.memory_space<vmem>>, vector<1x128xf32>
    %5 = vector.broadcast %4 : vector<1x128xf32> to vector<8x128xf32>
    %6 = arith.addf %3, %5 : vector<8x128xf32>
    %cst_5 = arith.constant 0.000000e+00 : f32
    %7 = vector.broadcast %cst_5 : f32 to vector<8x128xf32>
    %8 = arith.maximumf %6, %7 : vector<8x128xf32>
    %9 = arith.truncf %8 : vector<8x128xf32> to vector<8x128xbf16>
    %c0_6 = arith.constant 0 : index
    %c0_7 = arith.constant 0 : index
    %10 = vector.load %arg4[%c0_6, %c0_7] : memref<128x128xbf16, #tpu.memory_space<vmem>>, vector<128x128xbf16>
    %cst_8 = arith.constant dense<0.000000e+00> : vector<8x128xf32>
    %11 = tpu.matmul %9, %10, %cst_8 {dimension_numbers = #tpu.dot_dimension_numbers<[1], [0], [0], [1], [0, 0, 1, 1], [], []>} : vector<8x128xbf16>, vector<128x128xbf16>, vector<8x128xf32> -> vector<8x128xf32>
    %c0_9 = arith.constant 0 : index
    %c0_10 = arith.constant 0 : index
    %12 = vector.load %arg5[%c0_9, %c0_10] : memref<1x128xf32, #tpu.memory_space<vmem>>, vector<1x128xf32>
    %13 = vector.broadcast %12 : vector<1x128xf32> to vector<8x128xf32>
    %14 = arith.addf %11, %13 : vector<8x128xf32>
    %cst_11 = arith.constant 0.000000e+00 : f32
    %15 = vector.broadcast %cst_11 : f32 to vector<8x128xf32>
    %16 = arith.maximumf %14, %15 : vector<8x128xf32>
    %17 = arith.truncf %16 : vector<8x128xf32> to vector<8x128xbf16>
    %c0_12 = arith.constant 0 : index
    %c0_13 = arith.constant 0 : index
    %18 = vector.load %arg6[%c0_12, %c0_13] : memref<128x128xbf16, #tpu.memory_space<vmem>>, vector<128x128xbf16>
    %cst_14 = arith.constant dense<0.000000e+00> : vector<8x128xf32>
    %19 = tpu.matmul %17, %18, %cst_14 {dimension_numbers = #tpu.dot_dimension_numbers<[1], [0], [0], [1], [0, 0, 1, 1], [], []>} : vector<8x128xbf16>, vector<128x128xbf16>, vector<8x128xf32> -> vector<8x128xf32>
    %20 = vector.extract_strided_slice %19 {offsets = [0, 0], sizes = [8, 3], strides = [1, 1]} : vector<8x128xf32> to vector<8x3xf32>
    %c0_15 = arith.constant 0 : index
    %c0_16 = arith.constant 0 : index
    %21 = vector.load %arg7[%c0_15, %c0_16] : memref<1x3xf32, #tpu.memory_space<vmem>>, vector<1x3xf32>
    %22 = vector.broadcast %21 : vector<1x3xf32> to vector<8x3xf32>
    %23 = arith.addf %20, %22 : vector<8x3xf32>
    %c0_17 = arith.constant 0 : index
    %c0_18 = arith.constant 0 : index
    %24 = vector.load %arg8[%c0_17, %c0_18] : memref<8x3xf32, #tpu.memory_space<vmem>>, vector<8x3xf32>
    tpu.vector_store %arg8[%c0_17, %c0_18], %23 {strides = array<i32>} : memref<8x3xf32, #tpu.memory_space<vmem>>, vector<8x3xf32>,
    return
  }
  func.func @transform_0(%arg0: i32) -> (i32, i32) {
    %c0_i32 = arith.constant 0 : i32
    %c0_i32_0 = arith.constant 0 : i32
    return %arg0, %c0_i32 : i32, i32
  }
  func.func @transform_1(%arg0: i32) -> (i32, i32) {
    %c0_i32 = arith.constant 0 : i32
    %c0_i32_0 = arith.constant 0 : i32
    %c0_i32_1 = arith.constant 0 : i32
    return %c0_i32, %c0_i32_0 : i32, i32
  }
  func.func @transform_2(%arg0: i32) -> (i32, i32) {
    %c0_i32 = arith.constant 0 : i32
    %c0_i32_0 = arith.constant 0 : i32
    %c0_i32_1 = arith.constant 0 : i32
    return %c0_i32, %c0_i32_0 : i32, i32
  }
  func.func @transform_3(%arg0: i32) -> (i32, i32) {
    %c0_i32 = arith.constant 0 : i32
    %c0_i32_0 = arith.constant 0 : i32
    %c0_i32_1 = arith.constant 0 : i32
    return %c0_i32, %c0_i32_0 : i32, i32
  }
  func.func @transform_4(%arg0: i32) -> (i32, i32) {
    %c0_i32 = arith.constant 0 : i32
    %c0_i32_0 = arith.constant 0 : i32
    %c0_i32_1 = arith.constant 0 : i32
    return %c0_i32, %c0_i32_0 : i32, i32
  }
  func.func @transform_5(%arg0: i32) -> (i32, i32) {
    %c0_i32 = arith.constant 0 : i32
    %c0_i32_0 = arith.constant 0 : i32
    %c0_i32_1 = arith.constant 0 : i32
    return %c0_i32, %c0_i32_0 : i32, i32
  }
  func.func @transform_6(%arg0: i32) -> (i32, i32) {
    %c0_i32 = arith.constant 0 : i32
    %c0_i32_0 = arith.constant 0 : i32
    %c0_i32_1 = arith.constant 0 : i32
    return %c0_i32, %c0_i32_0 : i32, i32
  }
  func.func @transform_7(%arg0: i32) -> (i32, i32) {
    %c0_i32 = arith.constant 0 : i32
    %c0_i32_0 = arith.constant 0 : i32
    return %arg0, %c0_i32 : i32, i32
  }
}

</mosaic_0001>

<llo_original>
// kernel: multihead_mlp_pallas.1
$region0: #{multihead_mlp_pallas.1}
  #allocation0 [shape = 'u32[]', space=smem, size = 0x4, offset = 0x4, fixed_abs, tag = 'smem constant byte address 0x4 - core index']
  #allocation1 [shape = 'u32[144,128]{1,0:T(1,128)}', space=vmem, size = 0x12000, scoped, tag = 'internal scratch']
  %s0 = inlined_call_operand.vmem [shape: f32[8,32], index: 0, kind: input, shape index: {}]
  %s1 = inlined_call_operand.vmem [shape: bf16[32,128], index: 1, kind: input, shape index: {}]
  %s2 = inlined_call_operand.vmem [shape: f32[1,128], index: 2, kind: input, shape index: {}]
  %s3 = inlined_call_operand.vmem [shape: bf16[128,128], index: 3, kind: input, shape index: {}]
  %s4 = inlined_call_operand.vmem [shape: f32[1,128], index: 4, kind: input, shape index: {}]
  %s5 = inlined_call_operand.vmem [shape: bf16[128,128], index: 5, kind: input, shape index: {}]
  %s6 = inlined_call_operand.vmem [shape: f32[1,3], index: 6, kind: input, shape index: {}]
  %s7 = inlined_call_operand.vmem [shape: f32[8,3], index: 7, kind: output, shape index: {}]
  %s8 = sld [smem:[#allocation0]]
  $region38: #{multihead_mlp_pallas.1} parent=0
    _
  %s10 = ssub.s32 1, %s8
  %s11 = scalar_select 0, %s10, %s8
  // Predicated region
  $region2: #{multihead_mlp_pallas.1} parent=0 // pred_check
    _
  $region3: #{multihead_mlp_pallas.1} parent=0 // pred_check_branch
    %13 = sbr.rel (0) target = $region5
  $region4: #{multihead_mlp_pallas.1} parent=0 // pred_region
    _
  $region5: #{multihead_mlp_pallas.1} parent=0 // pred_fallthru
    _
  // Predicated region
  $region6: #{multihead_mlp_pallas.1} parent=0 // pred_check
    _
  $region7: #{multihead_mlp_pallas.1} parent=0 // pred_check_branch
    %15 = sbr.rel (0) target = $region9
  $region8: #{multihead_mlp_pallas.1} parent=0 // pred_region
    _
  $region9: #{multihead_mlp_pallas.1} parent=0 // pred_fallthru
    _
  // Predicated region
  $region10: #{multihead_mlp_pallas.1} parent=0 // pred_check
    _
  $region11: #{multihead_mlp_pallas.1} parent=0 // pred_check_branch
    %17 = sbr.rel (0) target = $region13
  $region12: #{multihead_mlp_pallas.1} parent=0 // pred_region
    _
  $region13: #{multihead_mlp_pallas.1} parent=0 // pred_fallthru
    _
  // Predicated region
  $region14: #{multihead_mlp_pallas.1} parent=0 // pred_check
    _
  $region15: #{multihead_mlp_pallas.1} parent=0 // pred_check_branch
    %19 = sbr.rel (0) target = $region17
  $region16: #{multihead_mlp_pallas.1} parent=0 // pred_region
    _
  $region17: #{multihead_mlp_pallas.1} parent=0 // pred_fallthru
    _
  // Predicated region
  $region18: #{multihead_mlp_pallas.1} parent=0 // pred_check
    _
  $region19: #{multihead_mlp_pallas.1} parent=0 // pred_check_branch
    %21 = sbr.rel (0) target = $region21
  $region20: #{multihead_mlp_pallas.1} parent=0 // pred_region
    _
  $region21: #{multihead_mlp_pallas.1} parent=0 // pred_fallthru
    _
  // Predicated region
  $region22: #{multihead_mlp_pallas.1} parent=0 // pred_check
    _
  $region23: #{multihead_mlp_pallas.1} parent=0 // pred_check_branch
    %23 = sbr.rel (0) target = $region25
  $region24: #{multihead_mlp_pallas.1} parent=0 // pred_region
    _
  $region25: #{multihead_mlp_pallas.1} parent=0 // pred_fallthru
    _
  // Predicated region
  $region26: #{multihead_mlp_pallas.1} parent=0 // pred_check
    _
  $region27: #{multihead_mlp_pallas.1} parent=0 // pred_check_branch
    %25 = sbr.rel (0) target = $region29
  $region28: #{multihead_mlp_pallas.1} parent=0 // pred_region
    _
  $region29: #{multihead_mlp_pallas.1} parent=0 // pred_fallthru
    _
  %v27 = vld [vmem:[%s0] sm:$0xff]
  %v28 = vpack.c.bf16 %v27, %v27
  %v29 = vld [vmem:[%s1] sm:$0xf]
  %v30 = vld [vmem:[%s1 + $0x4] sm:$0xf]
  %v31 = vld [vmem:[%s1 + $0x8] sm:$0xf]
  %v32 = vld [vmem:[%s1 + $0xc] sm:$0xf]
  %v33 = vld [vmem:[%s2] sm:$0x1]
  %v35 = vlaneseq
  %v36 = vshrl.u32 %v35, 7
  %v37 = vsub.s32 0, %v36
  %v38 = vrot.slane %v33, %v37
  %v44 = vunpack.c.l.b16 %v29
  %v45 = vunpack.c.l.b16 %v30
  %v46 = vunpack.c.l.b16 %v31
  %v47 = vunpack.c.l.b16 %v32
  %v48 = vpack.c.b16 %v45, %v44
  %v49 = vpack.c.b16 %v47, %v46
  %vm52 = vcmask 261120
  %v54 = vsel %vm52, %v28, 0
  %56 = vmatprep.subr.bf16.mxu0 0
  %57 = vmatpush1.bf16.msra.mxu0 0
  %58 = vmatprep.subr.bf16.mxu0 0
  %59 = vmatpush1.bf16.msra.mxu0 0
  %60 = vmatprep.subr.bf16.mxu0 0
  %61 = vmatpush1.bf16.msra.mxu0 0
  %62 = vmatprep.subr.bf16.mxu0 0
  %63 = vmatpush1.bf16.msra.mxu0 0
  %64 = vmatprep.subr.bf16.mxu0 0
  %65 = vmatpush1.bf16.msra.mxu0 0
  %66 = vmatprep.subr.bf16.mxu0 0
  %67 = vmatpush1.bf16.msra.mxu0 0
  %68 = vmatprep.subr.bf16.mxu0 0
  %69 = vmatpush1.bf16.msra.mxu0 %v49
  %70 = vmatprep.subr.bf16.mxu0 0
  %71 = vmatpush1.bf16.msra.mxu0 %v48
  %72 = vmatprep.subr.bf16.mxu0 0
  %73 = vmatpush2.bf16.msra.mxu0 0
  %74 = vmatprep.subr.bf16.mxu0 0
  %75 = vmatpush2.bf16.msra.mxu0 0
  %76 = vmatprep.subr.bf16.mxu0 0
  %77 = vmatpush2.bf16.msra.mxu0 0
  %78 = vmatprep.subr.bf16.mxu0 0
  %79 = vmatpush2.bf16.msra.mxu0 0
  %80 = vmatprep.subr.bf16.mxu0 0
  %81 = vmatpush2.bf16.msra.mxu0 0
  %82 = vmatprep.subr.bf16.mxu0 0
  %83 = vmatpush2.bf16.msra.mxu0 0
  %84 = vmatprep.subr.bf16.mxu0 0
  %85 = vmatpush2.bf16.msra.mxu0 0
  %86 = vmatprep.subr.bf16.mxu0 0
  %87 = vmatpush2.bf16.msra.mxu0 0
  %88 = vmatprep.mubr.bf16.mxu0 0
  %89 = vmatmul.mubr.bf16.gmra.mxu0 %v54
  %v90 = vpop.f32.mrf.mxu0
  %v91 = vadd.f32 %v38, %v90
  %v92 = vpop.f32.mrf.mxu0
  %v93 = vpop.f32.mrf.mxu0
  %v94 = vpop.f32.mrf.mxu0
  %95 = vdwg.mxu0
  %v96 = vmax.f32 %v91, 0.0
  %v97 = vpack.c.bf16 %v96, %v96
  %v98 = vld [vmem:[%s3] sm:$0xf]
  %v99 = vld [vmem:[%s3 + $0x4] sm:$0xf]
  %v100 = vld [vmem:[%s3 + $0x8] sm:$0xf]
  %v101 = vld [vmem:[%s3 + $0xc] sm:$0xf]
  %v102 = vld [vmem:[%s3 + $0x10] sm:$0xf]
  %v103 = vld [vmem:[%s3 + $0x14] sm:$0xf]
  %v104 = vld [vmem:[%s3 + $0x18] sm:$0xf]
  %v105 = vld [vmem:[%s3 + $0x1c] sm:$0xf]
  %v106 = vld [vmem:[%s3 + $0x20] sm:$0xf]
  %v107 = vld [vmem:[%s3 + $0x24] sm:$0xf]
  %v108 = vld [vmem:[%s3 + $0x28] sm:$0xf]
  %v109 = vld [vmem:[%s3 + $0x2c] sm:$0xf]
  %v110 = vld [vmem:[%s3 + $0x30] sm:$0xf]
  %v111 = vld [vmem:[%s3 + $0x34] sm:$0xf]
  %v112 = vld [vmem:[%s3 + $0x38] sm:$0xf]
  %v113 = vld [vmem:[%s3 + $0x3c] sm:$0xf]
  %v114 = vld [vmem:[%s4] sm:$0x1]
  %v116 = vlaneseq
  %v117 = vshrl.u32 %v116, 7
  %v118 = vsub.s32 0, %v117
  %v119 = vrot.slane %v114, %v118
  %v137 = vunpack.c.l.b16 %v98
  %v138 = vunpack.c.l.b16 %v99
  %v139 = vunpack.c.l.b16 %v100
  %v140 = vunpack.c.l.b16 %v101
  %v141 = vunpack.c.l.b16 %v102
  %v142 = vunpack.c.l.b16 %v103
  %v143 = vunpack.c.l.b16 %v104
  %v144 = vunpack.c.l.b16 %v105
  %v145 = vunpack.c.l.b16 %v106
  %v146 = vunpack.c.l.b16 %v107
  %v147 = vunpack.c.l.b16 %v108
  %v148 = vunpack.c.l.b16 %v109
  %v149 = vunpack.c.l.b16 %v110
  %v150 = vunpack.c.l.b16 %v111
  %v151 = vunpack.c.l.b16 %v112
  %v152 = vunpack.c.l.b16 %v113
  %v153 = vpack.c.b16 %v138, %v137
  %v154 = vpack.c.b16 %v140, %v139
  %v155 = vpack.c.b16 %v142, %v141
  %v156 = vpack.c.b16 %v144, %v143
  %v157 = vpack.c.b16 %v146, %v145
  %v158 = vpack.c.b16 %v148, %v147
  %v159 = vpack.c.b16 %v150, %v149
  %v160 = vpack.c.b16 %v152, %v151
  %169 = vmatprep.subr.bf16.mxu0 0
  %170 = vmatpush1.bf16.msra.mxu0 %v160
  %171 = vmatprep.subr.bf16.mxu0 0
  %172 = vmatpush1.bf16.msra.mxu0 %v159
  %173 = vmatprep.subr.bf16.mxu0 0
  %174 = vmatpush1.bf16.msra.mxu0 %v158
  %175 = vmatprep.subr.bf16.mxu0 0
  %176 = vmatpush1.bf16.msra.mxu0 %v157
  %177 = vmatprep.subr.bf16.mxu0 0
  %178 = vmatpush1.bf16.msra.mxu0 %v156
  %179 = vmatprep.subr.bf16.mxu0 0
  %180 = vmatpush1.bf16.msra.mxu0 %v155
  %181 = vmatprep.subr.bf16.mxu0 0
  %182 = vmatpush1.bf16.msra.mxu0 %v154
  %183 = vmatprep.subr.bf16.mxu0 0
  %184 = vmatpush1.bf16.msra.mxu0 %v153
  %185 = vmatprep.subr.bf16.mxu0 0
  %186 = vmatpush2.bf16.msra.mxu0 0
  %187 = vmatprep.subr.bf16.mxu0 0
  %188 = vmatpush2.bf16.msra.mxu0 0
  %189 = vmatprep.subr.bf16.mxu0 0
  %190 = vmatpush2.bf16.msra.mxu0 0
  %191 = vmatprep.subr.bf16.mxu0 0
  %192 = vmatpush2.bf16.msra.mxu0 0
  %193 = vmatprep.subr.bf16.mxu0 0
  %194 = vmatpush2.bf16.msra.mxu0 0
  %195 = vmatprep.subr.bf16.mxu0 0
  %196 = vmatpush2.bf16.msra.mxu0 0
  %197 = vmatprep.subr.bf16.mxu0 0
  %198 = vmatpush2.bf16.msra.mxu0 0
  %199 = vmatprep.subr.bf16.mxu0 0
  %200 = vmatpush2.bf16.msra.mxu0 0
  %201 = vmatprep.mubr.bf16.mxu0 0
  %202 = vmatmul.mubr.bf16.gmra.mxu0 %v97
  %v203 = vpop.f32.mrf.mxu0
  %v204 = vadd.f32 %v119, %v203
  %v205 = vpop.f32.mrf.mxu0
  %v206 = vpop.f32.mrf.mxu0
  %v207 = vpop.f32.mrf.mxu0
  %208 = vdwg.mxu0
  %v209 = vmax.f32 %v204, 0.0
  %v210 = vpack.c.bf16 %v209, %v209
  %v211 = vld [vmem:[%s5] sm:$0xf]
  %v212 = vld [vmem:[%s5 + $0x4] sm:$0xf]
  %v213 = vld [vmem:[%s5 + $0x8] sm:$0xf]
  %v214 = vld [vmem:[%s5 + $0xc] sm:$0xf]
  %v215 = vld [vmem:[%s5 + $0x10] sm:$0xf]
  %v216 = vld [vmem:[%s5 + $0x14] sm:$0xf]
  %v217 = vld [vmem:[%s5 + $0x18] sm:$0xf]
  %v218 = vld [vmem:[%s5 + $0x1c] sm:$0xf]
  %v219 = vld [vmem:[%s5 + $0x20] sm:$0xf]
  %v220 = vld [vmem:[%s5 + $0x24] sm:$0xf]
  %v221 = vld [vmem:[%s5 + $0x28] sm:$0xf]
  %v222 = vld [vmem:[%s5 + $0x2c] sm:$0xf]
  %v223 = vld [vmem:[%s5 + $0x30] sm:$0xf]
  %v224 = vld [vmem:[%s5 + $0x34] sm:$0xf]
  %v225 = vld [vmem:[%s5 + $0x38] sm:$0xf]
  %v226 = vld [vmem:[%s5 + $0x3c] sm:$0xf]
  %v243 = vunpack.c.l.b16 %v211
  %v244 = vunpack.c.l.b16 %v212
  %v245 = vunpack.c.l.b16 %v213
  %v246 = vunpack.c.l.b16 %v214
  %v247 = vunpack.c.l.b16 %v215
  %v248 = vunpack.c.l.b16 %v216
  %v249 = vunpack.c.l.b16 %v217
  %v250 = vunpack.c.l.b16 %v218
  %v251 = vunpack.c.l.b16 %v219
  %v252 = vunpack.c.l.b16 %v220
  %v253 = vunpack.c.l.b16 %v221
  %v254 = vunpack.c.l.b16 %v222
  %v255 = vunpack.c.l.b16 %v223
  %v256 = vunpack.c.l.b16 %v224
  %v257 = vunpack.c.l.b16 %v225
  %v258 = vunpack.c.l.b16 %v226
  %v259 = vpack.c.b16 %v244, %v243
  %v260 = vpack.c.b16 %v246, %v245
  %v261 = vpack.c.b16 %v248, %v247
  %v262 = vpack.c.b16 %v250, %v249
  %v263 = vpack.c.b16 %v252, %v251
  %v264 = vpack.c.b16 %v254, %v253
  %v265 = vpack.c.b16 %v256, %v255
  %v266 = vpack.c.b16 %v258, %v257
  %275 = vmatprep.subr.bf16.mxu0 0
  %276 = vmatpush1.bf16.msra.mxu0 %v266
  %277 = vmatprep.subr.bf16.mxu0 0
  %278 = vmatpush1.bf16.msra.mxu0 %v265
  %279 = vmatprep.subr.bf16.mxu0 0
  %280 = vmatpush1.bf16.msra.mxu0 %v264
  %281 = vmatprep.subr.bf16.mxu0 0
  %282 = vmatpush1.bf16.msra.mxu0 %v263
  %283 = vmatprep.subr.bf16.mxu0 0
  %284 = vmatpush1.bf16.msra.mxu0 %v262
  %285 = vmatprep.subr.bf16.mxu0 0
  %286 = vmatpush1.bf16.msra.mxu0 %v261
  %287 = vmatprep.subr.bf16.mxu0 0
  %288 = vmatpush1.bf16.msra.mxu0 %v260
  %289 = vmatprep.subr.bf16.mxu0 0
  %290 = vmatpush1.bf16.msra.mxu0 %v259
  %291 = vmatprep.subr.bf16.mxu0 0
  %292 = vmatpush2.bf16.msra.mxu0 0
  %293 = vmatprep.subr.bf16.mxu0 0
  %294 = vmatpush2.bf16.msra.mxu0 0
  %295 = vmatprep.subr.bf16.mxu0 0
  %296 = vmatpush2.bf16.msra.mxu0 0
  %297 = vmatprep.subr.bf16.mxu0 0
  %298 = vmatpush2.bf16.msra.mxu0 0
  %299 = vmatprep.subr.bf16.mxu0 0
  %300 = vmatpush2.bf16.msra.mxu0 0
  %301 = vmatprep.subr.bf16.mxu0 0
  %302 = vmatpush2.bf16.msra.mxu0 0
  %303 = vmatprep.subr.bf16.mxu0 0
  %304 = vmatpush2.bf16.msra.mxu0 0
  %305 = vmatprep.subr.bf16.mxu0 0
  %306 = vmatpush2.bf16.msra.mxu0 0
  %307 = vmatprep.mubr.bf16.mxu0 0
  %308 = vmatmul.mubr.bf16.gmra.mxu0 %v210
  %v309 = vpop.f32.mrf.mxu0
  %v310 = vadd.f32 0.0, %v309
  %v311 = vpop.f32.mrf.mxu0
  %v312 = vpop.f32.mrf.mxu0
  %v313 = vpop.f32.mrf.mxu0
  %314 = vdwg.mxu0
  %v315 = vld [vmem:[%s6] sm:$0x1]
  %v317 = vlaneseq
  %v318 = vshrl.u32 %v317, 7
  %v319 = vsub.s32 0, %v318
  %v320 = vrot.slane %v315, %v319
  %v322 = vadd.f32 %v310, %v320
  %vm323 = vcmask 23552
  %324 = vst.msk [vmem:[%s7] sm:$0xff] %vm323, %v322
  // Predicated region
  $region30: #{multihead_mlp_pallas.1} parent=0 // pred_check
    _
  $region31: #{multihead_mlp_pallas.1} parent=0 // pred_check_branch
    %326 = sbr.rel (0) target = $region33
  $region32: #{multihead_mlp_pallas.1} parent=0 // pred_region
    _
  $region33: #{multihead_mlp_pallas.1} parent=0 // pred_fallthru
    _
  // Predicated region
  $region34: #{multihead_mlp_pallas.1} parent=0 // pred_check
    _
  $region35: #{multihead_mlp_pallas.1} parent=0 // pred_check_branch
    %328 = sbr.rel (0) target = $region37
  $region36: #{multihead_mlp_pallas.1} parent=0 // pred_region
    _
  $region37: #{multihead_mlp_pallas.1} parent=0 // pred_fallthru
    _

</llo_original>
